<compile_context>
chip_gen: v6e
topology: v6e:2x2x1
jax: 0.10.0
libtpu: 0.0.40
codegen_flags: <defaults>
</compile_context>

<pallas_src>
import jax
import jax.numpy as jnp
from jax.experimental import pallas as pl
from jax.experimental.pallas import tpu as pltpu


def _cdiv(a, b):
    return -(-a // b)


def _round_up(a, m):
    return _cdiv(a, m) * m


def _max_tile_rows():
    """Largest sublane-row tile that fits the default scoped VMEM (x2 buffers)."""
    try:
        kind = jax.devices()[0].device_kind.lower()
    except Exception:
        kind = ""
    if ("v6" in kind) or ("v7" in kind):
        return 4096   # 6 MiB in + 2 MiB out per buffer -> 16 MiB double-buffered (< 32 MiB)
    return 2048       # v5e & older: 8 MiB double-buffered (< 16 MiB default scoped VMEM)


def _choose_tiling(rows, max_rows):
    """Pick (tile_rows, grid).  Prefers an exact split (no tail padding) with an
    even grid >= 2 so v7x's two TensorCores both get work; falls back to a
    rounded tile (last tile zero-padded by the wrapper)."""
    min_tiles = _cdiv(rows, max_rows)
    base = max(2, min_tiles) if rows >= 16 else min_tiles
    best = None
    for g in range(base, base + 9):
        if rows % g:
            continue
        t = rows // g
        if t > max_rows or (g > 1 and t % 8):
            continue
        if g % 2 == 0 or g == 1:
            return t, g
        if best is None:
            best = (t, g)
    if best is not None:
        return best
    if base <= 1:
        return rows, 1                       # single full-extent block (any row count)
    t = min(max_rows, _round_up(_cdiv(rows, base), 8))
    return t, _cdiv(rows, t)


def _sphere_sdf_kernel(radius_ref, pts_ref, crow_ref, sel_ref, out_ref):
    # radius_ref: SMEM (1,)        f32
    # pts_ref:    VMEM (T, 384)    f32  -- 128 points per row, xyz interleaved on lanes
    # crow_ref:   VMEM (1, 384)    f32  -- [cx,cy,cz] tiled 128x
    # sel_ref:    VMEM (384, 128)  bf16 -- sel[l,p] = (l//3 == p)
    # out_ref:    VMEM (T, 128)    f32  -- signed distance per point
    diff = pts_ref[...] - crow_ref[...]          # broadcast over sublanes
    sq = diff * diff                             # f32

    # Lane de-interleave + per-point 3-way reduce as one MXU contraction:
    #   ssq[r, p] = sum_l sq[r, l] * sel[l, p].
    # hi/lo bf16 split keeps ~f32 accuracy on the fast bf16 MXU path.
    sq_hi = sq.astype(jnp.bfloat16)
    sq_lo = (sq - sq_hi.astype(jnp.float32)).astype(jnp.bfloat16)
    sel = sel_ref[...]
    ssq = (jnp.dot(sq_hi, sel, preferred_element_type=jnp.float32)
           + jnp.dot(sq_lo, sel, preferred_element_type=jnp.float32))
    ssq = jnp.maximum(ssq, 0.0)                  # guard sqrt against -eps rounding

    out_ref[...] = jnp.sqrt(ssq) - radius_ref[0]


def sphere_sdf_distance(points, center3, radius1):
    """points: any shape flattenable to (-1, 3).  Returns (N, 1) f32 distances.

    Not jitted on purpose: call it from inside your own jit so the free
    reshapes / optional tail slice fuse with producer/consumer ops."""
    pts = jnp.reshape(points, (-1, 3)).astype(jnp.float32)
    n = pts.shape[0]
    if n == 0:
        return jnp.zeros((0, 1), jnp.float32)

    rows = _cdiv(n, 128)
    tile_r, grid = _choose_tiling(rows, _max_tile_rows())
    rows_pad = tile_r * grid
    n_pad = rows_pad * 128

    flat = pts.reshape(-1)                       # free view of the AoS buffer
    if n_pad != n:
        # Ragged shapes only: one extra HBM pass to zero-pad the tail.
        flat = jnp.pad(flat, (0, 3 * (n_pad - n)))
    pts2d = flat.reshape(rows_pad, 384)          # free view when no pad was needed

    # Constant 0/1 selection matrix (constant-folded under jit, DMA'd once).
    lane = jnp.arange(384, dtype=jnp.int32)[:, None]
    pidx = jnp.arange(128, dtype=jnp.int32)[None, :]
    sel = (lane // 3 == pidx).astype(jnp.bfloat16)              # (384, 128)

    c_row = jnp.tile(jnp.reshape(center3, (3,)).astype(jnp.float32), 128)
    c_row = c_row.reshape(1, 384)
    radius = jnp.reshape(radius1, (1,)).astype(jnp.float32)

    cost = pl.CostEstimate(
        flops=n_pad * 1552,          # 2 bf16 matmuls (2*768) + elementwise
        transcendentals=n_pad,       # one sqrt per point
        bytes_accessed=n_pad * 16,   # 12 B read + 4 B write per point
    )

    out = pl.pallas_call(
        _sphere_sdf_kernel,
        out_shape=jax.ShapeDtypeStruct((rows_pad, 128), jnp.float32),
        grid_spec=pltpu.PrefetchScalarGridSpec(
            num_scalar_prefetch=0,
            grid=(grid,),
            in_specs=[
                pl.BlockSpec(memory_space=pltpu.MemorySpace.SMEM),   # radius (1,)
                pl.BlockSpec((tile_r, 384), lambda i: (i, 0)),       # AoS point rows
                pl.BlockSpec((1, 384), lambda i: (0, 0)),            # center row
                pl.BlockSpec((384, 128), lambda i: (0, 0)),          # selection matrix
            ],
            out_specs=pl.BlockSpec((tile_r, 128), lambda i: (i, 0)),
        ),
        compiler_params=pltpu.CompilerParams(
            dimension_semantics=("parallel",),   # no carry; v7x shards tiles across TCs
        ),
        cost_estimate=cost,
    )(radius, pts2d, c_row, sel)

    dist = out.reshape(-1, 1)                    # point order; free reshape
    if n_pad != n:
        dist = dist[:n]                          # tail slice only for ragged shapes
    return dist


# Jitted convenience entry point for standalone (eager) callers.
_sphere_sdf_distance_jit = jax.jit(sphere_sdf_distance)


class SDFSurface:
    """JAX/Pallas port of SDFSurface with cfg.sdf.type == 'sphere'."""

    def __init__(self):
        # Deterministic parameter init (shapes match the PyTorch module):
        #   SphereSDF.radius : scalar
        #   SphereSDF.center : (1, 3)
        #   SDFSurface.feature: ones_like(cfg.feature.val).unsqueeze(0) -> (1, 3)
        self.radius = jnp.asarray([1.0], dtype=jnp.float32)                  # (1,)
        self.center = jnp.asarray([[0.25, -0.10, 0.30]], dtype=jnp.float32)  # (1, 3)
        self.feature = jnp.ones((1, 3), dtype=jnp.float32)  # unused in forward
        self.rainbow = False

    def get_distance(self, points):
        # For embedding inside a larger jit, call sphere_sdf_distance(...) directly.
        return _sphere_sdf_distance_jit(points, self.center[0], self.radius)

    def __call__(self, points):
        return self.get_distance(points)

    # get_color is not part of forward(); provided in plain JAX for completeness.
    def get_color(self, points):
        pts = jnp.reshape(points, (-1, 3)).astype(jnp.float32)
        if self.rainbow:
            base_color = jnp.clip(jnp.abs(pts), 0.02, 0.98)
        else:
            base_color = 1.0
        return base_color * self.feature * jnp.ones((pts.shape[0], 1), jnp.float32)


if __name__ == "__main__":
    model = SDFSurface()

    # Small input consistent with the module: arbitrary leading dims, last dim 3.
    # N = 1024 points -> aligned fast path (no padding), single tile.
    points = jax.random.normal(jax.random.PRNGKey(0), (2, 512, 3), dtype=jnp.float32) * 2.0
    dist = jax.block_until_ready(model(points))

    pts = points.reshape(-1, 3)
    ref = jnp.linalg.norm(pts - model.center, axis=-1, keepdims=True) - model.radius[0]
    assert dist.shape == (pts.shape[0], 1)
    assert jnp.allclose(dist, ref, atol=2e-5, rtol=2e-5)

    # Second check: ragged point count (exercises grid > 1 and the tail-pad path).
    points2 = jax.random.normal(jax.random.PRNGKey(1), (12_345, 3), dtype=jnp.float32) * 3.0
    dist2 = jax.block_until_ready(model(points2))
    ref2 = (jnp.linalg.norm(points2 - model.center, axis=-1, keepdims=True)
            - model.radius[0])
    assert dist2.shape == (points2.shape[0], 1)
    assert jnp.allclose(dist2, ref2, atol=2e-5, rtol=2e-5)

    print("KERNEL_OK")
</pallas_src>

<mosaic_0001>
module attributes {stable_mosaic.version = 11 : i64} {
  func.func @_sphere_sdf_kernel(%arg0: i32, %arg1: memref<1xf32, #tpu.memory_space<smem>>, %arg2: memref<8x384xf32, #tpu.memory_space<vmem>>, %arg3: memref<1x384xf32, #tpu.memory_space<vmem>>, %arg4: memref<384x128xbf16, #tpu.memory_space<vmem>>, %arg5: memref<8x128xf32, #tpu.memory_space<vmem>>) attributes {dimension_semantics = [#tpu.dimension_semantics<parallel>], iteration_bounds = array<i64: 1>, scalar_prefetch = 0 : i64, scratch_operands = 0 : i64, tpu.core_type = #tpu.core_type<tc>, window_params = [{transform_indices = @transform_0, window_bounds = array<i64: 1>}, {transform_indices = @transform_1, window_bounds = array<i64: 8, 384>}, {pipeline_mode = #tpu.pipeline_mode<synchronous>, transform_indices = @transform_2, window_bounds = array<i64: 1, 384>}, {pipeline_mode = #tpu.pipeline_mode<synchronous>, transform_indices = @transform_3, window_bounds = array<i64: 384, 128>}, {transform_indices = @transform_4, window_bounds = array<i64: 8, 128>}]} {
    %c0 = arith.constant 0 : index
    %c0_0 = arith.constant 0 : index
    %0 = vector.load %arg2[%c0, %c0_0] : memref<8x384xf32, #tpu.memory_space<vmem>>, vector<8x384xf32>
    %c0_1 = arith.constant 0 : index
    %c0_2 = arith.constant 0 : index
    %1 = vector.load %arg3[%c0_1, %c0_2] : memref<1x384xf32, #tpu.memory_space<vmem>>, vector<1x384xf32>
    %2 = vector.broadcast %1 : vector<1x384xf32> to vector<8x384xf32>
    %3 = arith.subf %0, %2 : vector<8x384xf32>
    %4 = arith.mulf %3, %3 : vector<8x384xf32>
    %5 = arith.truncf %4 : vector<8x384xf32> to vector<8x384xbf16>
    %6 = arith.extf %5 : vector<8x384xbf16> to vector<8x384xf32>
    %7 = arith.subf %4, %6 : vector<8x384xf32>
    %8 = arith.truncf %7 : vector<8x384xf32> to vector<8x384xbf16>
    %c0_3 = arith.constant 0 : index
    %c0_4 = arith.constant 0 : index
    %9 = vector.load %arg4[%c0_3, %c0_4] : memref<384x128xbf16, #tpu.memory_space<vmem>>, vector<384x128xbf16>
    %cst = arith.constant dense<0.000000e+00> : vector<8x128xf32>
    %10 = tpu.matmul %5, %9, %cst {dimension_numbers = #tpu.dot_dimension_numbers<[1], [0], [0], [1], [0, 0, 1, 1], [], []>} : vector<8x384xbf16>, vector<384x128xbf16>, vector<8x128xf32> -> vector<8x128xf32>
    %cst_5 = arith.constant dense<0.000000e+00> : vector<8x128xf32>
    %11 = tpu.matmul %8, %9, %cst_5 {dimension_numbers = #tpu.dot_dimension_numbers<[1], [0], [0], [1], [0, 0, 1, 1], [], []>} : vector<8x384xbf16>, vector<384x128xbf16>, vector<8x128xf32> -> vector<8x128xf32>
    %12 = arith.addf %10, %11 : vector<8x128xf32>
    %cst_6 = arith.constant 0.000000e+00 : f32
    %13 = vector.broadcast %cst_6 : f32 to vector<8x128xf32>
    %14 = arith.maximumf %12, %13 : vector<8x128xf32>
    %15 = math.sqrt %14 : vector<8x128xf32>
    %c0_7 = arith.constant 0 : index
    %16 = memref.load %arg1[%c0_7] : memref<1xf32, #tpu.memory_space<smem>>
    %17 = vector.broadcast %16 : f32 to vector<8x128xf32>
    %18 = arith.subf %15, %17 : vector<8x128xf32>
    %c0_8 = arith.constant 0 : index
    %c0_9 = arith.constant 0 : index
    %19 = vector.load %arg5[%c0_8, %c0_9] : memref<8x128xf32, #tpu.memory_space<vmem>>, vector<8x128xf32>
    tpu.vector_store %arg5[%c0_8, %c0_9], %18 {strides = array<i32>} : memref<8x128xf32, #tpu.memory_space<vmem>>, vector<8x128xf32>,
    return
  }
  func.func @transform_0(%arg0: i32) -> i32 {
    %c0_i32 = arith.constant 0 : i32
    %c0_i32_0 = arith.constant 0 : i32
    return %c0_i32 : i32
  }
  func.func @transform_1(%arg0: i32) -> (i32, i32) {
    %c0_i32 = arith.constant 0 : i32
    %c0_i32_0 = arith.constant 0 : i32
    return %arg0, %c0_i32 : i32, i32
  }
  func.func @transform_2(%arg0: i32) -> (i32, i32) {
    %c0_i32 = arith.constant 0 : i32
    %c0_i32_0 = arith.constant 0 : i32
    %c0_i32_1 = arith.constant 0 : i32
    return %c0_i32, %c0_i32_0 : i32, i32
  }
  func.func @transform_3(%arg0: i32) -> (i32, i32) {
    %c0_i32 = arith.constant 0 : i32
    %c0_i32_0 = arith.constant 0 : i32
    %c0_i32_1 = arith.constant 0 : i32
    return %c0_i32, %c0_i32_0 : i32, i32
  }
  func.func @transform_4(%arg0: i32) -> (i32, i32) {
    %c0_i32 = arith.constant 0 : i32
    %c0_i32_0 = arith.constant 0 : i32
    return %arg0, %c0_i32 : i32, i32
  }
}

</mosaic_0001>

<llo_original>
// kernel: tile.8
$region0: #{tile.8}
  #allocation0 [shape = 's32[1]{0}', space=sflag, size = 0x4, scoped, tag = 'scoped memory for tile.8']
  %s0 = inlined_call_operand.vmem [shape: f32[3], index: 0, kind: input, shape index: {}]
  %s1 = inlined_call_operand.vmem [shape: f32[128,3], index: 1, kind: output, shape index: {}]
  // Predicated region
  $region2: #{tile.8} parent=0 // pred_check
    _
  $region3: #{tile.8} parent=0 // pred_check_branch
    %3 = sbr.rel (0) target = $region5
  $region4: #{tile.8} parent=0 // pred_region
    _
  $region5: #{tile.8} parent=0 // pred_fallthru
    _
  %v4 = vld [vmem:[%s0] ss:$0 sm:$0xff]
  %5 = vst [vmem:[%s1] sm:$0xff] %v4
  %s6 = scalar_lea.vmem %s1, 8
  %7 = vst [vmem:[%s6] sm:$0xff] %v4
  %s8 = scalar_lea.vmem %s1, 16
  %9 = vst [vmem:[%s8] sm:$0xff] %v4
  %s10 = scalar_lea.vmem %s1, 24
  %11 = vst [vmem:[%s10] sm:$0xff] %v4
  %s12 = scalar_lea.vmem %s1, 32
  %13 = vst [vmem:[%s12] sm:$0xff] %v4
  %s14 = scalar_lea.vmem %s1, 40
  %15 = vst [vmem:[%s14] sm:$0xff] %v4
  %s16 = scalar_lea.vmem %s1, 48
  %17 = vst [vmem:[%s16] sm:$0xff] %v4
  %s18 = scalar_lea.vmem %s1, 56
  %19 = vst [vmem:[%s18] sm:$0xff] %v4
  %s20 = scalar_lea.vmem %s1, 64
  %21 = vst [vmem:[%s20] sm:$0xff] %v4
  %s22 = scalar_lea.vmem %s1, 72
  %23 = vst [vmem:[%s22] sm:$0xff] %v4
  %s24 = scalar_lea.vmem %s1, 80
  %25 = vst [vmem:[%s24] sm:$0xff] %v4
  %s26 = scalar_lea.vmem %s1, 88
  %27 = vst [vmem:[%s26] sm:$0xff] %v4
  %s28 = scalar_lea.vmem %s1, 96
  %29 = vst [vmem:[%s28] sm:$0xff] %v4
  %s30 = scalar_lea.vmem %s1, 104
  %31 = vst [vmem:[%s30] sm:$0xff] %v4
  %s32 = scalar_lea.vmem %s1, 112
  %33 = vst [vmem:[%s32] sm:$0xff] %v4
  %s34 = scalar_lea.vmem %s1, 120
  %35 = vst [vmem:[%s34] sm:$0xff] %v4

// kernel: tile.9
$region0: #{tile.9}
  %s0 = inlined_call_operand.vmem [shape: f32[128,3], index: 0, kind: input, shape index: {}]
  %s1 = inlined_call_operand.vmem [shape: f32[1,384], index: 1, kind: output, shape index: {}]
  $region1: #{tile.9} parent=0
    #allocation0 [shape = 'u8[12288]{0}', space=vmem, size = 0x3000, scoped, tag = 'scoped mem for output reshape']
    %v2 = vld [vmem:[%s0] sm:$0x1]
    %vm3 = vcmask 23552
    %4 = vst.msk [vmem:[#allocation0] sm:$0x1] %vm3, %v2
    %s5 = scalar_lea.vmem %s0, 85
    %v6 = vld [vmem:[%s5] sm:$0x1]
    %s7 = scalar_lea.vmem %s0, 85
    %v8 = vld [vmem:[%s7] sm:$0x1]
    %vm9 = vcmask 7168
    %v10 = vsel %vm9, %v8, %v6
    %11 = vrot.lane.b32.xlu0 %v10, 127
    %v12 = vpop.permute.xlu0 %11
    %vm13 = vcmask 15360
    %s14 = scalar_lea.vmem [#allocation0], 16
    %15 = vst.msk [vmem:[%s14] sm:$0x1] %vm13, %v12
    %vm16 = vcmask 1048568
    %s17 = scalar_lea.vmem [#allocation0], 8
    %18 = vst.msk [vmem:[%s17] sm:$0x1] %vm16, %v12
    %s19 = scalar_lea.vmem %s0, 42
    %v20 = vld [vmem:[%s19] sm:$0x1]
    %s21 = scalar_lea.vmem %s0, 42
    %v22 = vld [vmem:[%s21] sm:$0x1]
    %vm23 = vcmask 15360
    %v24 = vsel %vm23, %v22, %v20
    %25 = vrot.lane.b32.xlu0 %v24, 126
    %v26 = vpop.permute.xlu0 %25
    %vm27 = vcmask 7168
    %s28 = scalar_lea.vmem [#allocation0], 8
    %29 = vst.msk [vmem:[%s28] sm:$0x1] %vm27, %v26
    %vm30 = vcmask 1048560
    %31 = vst.msk [vmem:[#allocation0] sm:$0x1] %vm30, %v26
    %s32 = scalar_lea.vmem %s0, 127
    %v33 = vld [vmem:[%s32] sm:$0x1]
    %34 = vrot.lane.b32.xlu0 %v33, 125
    %v35 = vpop.permute.xlu0 %34
    %vm36 = vcmask 1048552
    %s37 = scalar_lea.vmem [#allocation0], 16
    %38 = vst.msk [vmem:[%s37] sm:$0x1] %vm36, %v35
    %s39 = scalar_lea.vmem %s0, 84
    %v40 = vld [vmem:[%s39] sm:$0x1]
    %41 = vrot.lane.b32.xlu0 %v40, 124
    %v42 = vpop.permute.xlu0 %41
    %vm43 = vcmask 1040352
    %s44 = scalar_lea.vmem [#allocation0], 8
    %45 = vst.msk [vmem:[%s44] sm:$0x1] %vm43, %v42
    %s46 = scalar_lea.vmem %s0, 41
    %v47 = vld [vmem:[%s46] sm:$0x1]
    %48 = vrot.lane.b32.xlu0 %v47, 123
    %v49 = vpop.permute.xlu0 %48
    %vm50 = vcmask 1032152
    %51 = vst.msk [vmem:[#allocation0] sm:$0x1] %vm50, %v49
    %s52 = scalar_lea.vmem %s0, 126
    %v53 = vld [vmem:[%s52] sm:$0x1]
    %54 = vrot.lane.b32.xlu0 %v53, 122
    %v55 = vpop.permute.xlu0 %54
    %vm56 = vcmask 1023952
    %s57 = scalar_lea.vmem [#allocation0], 16
    %58 = vst.msk [vmem:[%s57] sm:$0x1] %vm56, %v55
    %s59 = scalar_lea.vmem %s0, 83
    %v60 = vld [vmem:[%s59] sm:$0x1]
    %61 = vrot.lane.b32.xlu0 %v60, 121
    %v62 = vpop.permute.xlu0 %61
    %vm63 = vcmask 1015752
    %s64 = scalar_lea.vmem [#allocation0], 8
    %65 = vst.msk [vmem:[%s64] sm:$0x1] %vm63, %v62
    %s66 = scalar_lea.vmem %s0, 40
    %v67 = vld [vmem:[%s66] sm:$0x1]
    %68 = vrot.lane.b32.xlu0 %v67, 120
    %v69 = vpop.permute.xlu0 %68
    %vm70 = vcmask 1007552
    %71 = vst.msk [vmem:[#allocation0] sm:$0x1] %vm70, %v69
    %s72 = scalar_lea.vmem %s0, 125
    %v73 = vld [vmem:[%s72] sm:$0x1]
    %74 = vrot.lane.b32.xlu0 %v73, 119
    %v75 = vpop.permute.xlu0 %74
    %vm76 = vcmask 999352
    %s77 = scalar_lea.vmem [#allocation0], 16
    %78 = vst.msk [vmem:[%s77] sm:$0x1] %vm76, %v75
    %s79 = scalar_lea.vmem %s0, 82
    %v80 = vld [vmem:[%s79] sm:$0x1]
    %81 = vrot.lane.b32.xlu0 %v80, 118
    %v82 = vpop.permute.xlu0 %81
    %vm83 = vcmask 991152
    %s84 = scalar_lea.vmem [#allocation0], 8
    %85 = vst.msk [vmem:[%s84] sm:$0x1] %vm83, %v82
    %s86 = scalar_lea.vmem %s0, 39
    %v87 = vld [vmem:[%s86] sm:$0x1]
    %88 = vrot.lane.b32.xlu0 %v87, 117
    %v89 = vpop.permute.xlu0 %88
    %vm90 = vcmask 982952
    %91 = vst.msk [vmem:[#allocation0] sm:$0x1] %vm90, %v89
    %s92 = scalar_lea.vmem %s0, 124
    %v93 = vld [vmem:[%s92] sm:$0x1]
    %94 = vrot.lane.b32.xlu0 %v93, 116
    %v95 = vpop.permute.xlu0 %94
    %vm96 = vcmask 974752
    %s97 = scalar_lea.vmem [#allocation0], 16
    %98 = vst.msk [vmem:[%s97] sm:$0x1] %vm96, %v95
    %s99 = scalar_lea.vmem %s0, 81
    %v100 = vld [vmem:[%s99] sm:$0x1]
    %101 = vrot.lane.b32.xlu0 %v100, 115
    %v102 = vpop.permute.xlu0 %101
    %vm103 = vcmask 966552
    %s104 = scalar_lea.vmem [#allocation0], 8
    %105 = vst.msk [vmem:[%s104] sm:$0x1] %vm103, %v102
    %s106 = scalar_lea.vmem %s0, 38
    %v107 = vld [vmem:[%s106] sm:$0x1]
    %108 = vrot.lane.b32.xlu0 %v107, 114
    %v109 = vpop.permute.xlu0 %108
    %vm110 = vcmask 958352
    %111 = vst.msk [vmem:[#allocation0] sm:$0x1] %vm110, %v109
    %s112 = scalar_lea.vmem %s0, 123
    %v113 = vld [vmem:[%s112] sm:$0x1]
    %114 = vrot.lane.b32.xlu0 %v113, 113
    %v115 = vpop.permute.xlu0 %114
    %vm116 = vcmask 950152
    %s117 = scalar_lea.vmem [#allocation0], 16
    %118 = vst.msk [vmem:[%s117] sm:$0x1] %vm116, %v115
    %s119 = scalar_lea.vmem %s0, 80
    %v120 = vld [vmem:[%s119] sm:$0x1]
    %121 = vrot.lane.b32.xlu0 %v120, 112
    %v122 = vpop.permute.xlu0 %121
    %vm123 = vcmask 941952
    %s124 = scalar_lea.vmem [#allocation0], 8
    %125 = vst.msk [vmem:[%s124] sm:$0x1] %vm123, %v122
    %s126 = scalar_lea.vmem %s0, 37
    %v127 = vld [vmem:[%s126] sm:$0x1]
    %128 = vrot.lane.b32.xlu0 %v127, 111
    %v129 = vpop.permute.xlu0 %128
    %vm130 = vcmask 933752
    %131 = vst.msk [vmem:[#allocation0] sm:$0x1] %vm130, %v129
    %s132 = scalar_lea.vmem %s0, 122
    %v133 = vld [vmem:[%s132] sm:$0x1]
    %134 = vrot.lane.b32.xlu0 %v133, 110
    %v135 = vpop.permute.xlu0 %134
    %vm136 = vcmask 925552
    %s137 = scalar_lea.vmem [#allocation0], 16
    %138 = vst.msk [vmem:[%s137] sm:$0x1] %vm136, %v135
    %s139 = scalar_lea.vmem %s0, 79
    %v140 = vld [vmem:[%s139] sm:$0x1]
    %141 = vrot.lane.b32.xlu0 %v140, 109
    %v142 = vpop.permute.xlu0 %141
    %vm143 = vcmask 917352
    %s144 = scalar_lea.vmem [#allocation0], 8
    %145 = vst.msk [vmem:[%s144] sm:$0x1] %vm143, %v142
    %s146 = scalar_lea.vmem %s0, 36
    %v147 = vld [vmem:[%s146] sm:$0x1]
    %148 = vrot.lane.b32.xlu0 %v147, 108
    %v149 = vpop.permute.xlu0 %148
    %vm150 = vcmask 909152
    %151 = vst.msk [vmem:[#allocation0] sm:$0x1] %vm150, %v149
    %s152 = scalar_lea.vmem %s0, 121
    %v153 = vld [vmem:[%s152] sm:$0x1]
    %154 = vrot.lane.b32.xlu0 %v153, 107
    %v155 = vpop.permute.xlu0 %154
    %vm156 = vcmask 900952
    %s157 = scalar_lea.vmem [#allocation0], 16
    %158 = vst.msk [vmem:[%s157] sm:$0x1] %vm156, %v155
    %s159 = scalar_lea.vmem %s0, 78
    %v160 = vld [vmem:[%s159] sm:$0x1]
    %161 = vrot.lane.b32.xlu0 %v160, 106
    %v162 = vpop.permute.xlu0 %161
    %vm163 = vcmask 892752
    %s164 = scalar_lea.vmem [#allocation0], 8
    %165 = vst.msk [vmem:[%s164] sm:$0x1] %vm163, %v162
    %s166 = scalar_lea.vmem %s0, 35
    %v167 = vld [vmem:[%s166] sm:$0x1]
    %168 = vrot.lane.b32.xlu0 %v167, 105
    %v169 = vpop.permute.xlu0 %168
    %vm170 = vcmask 884552
    %171 = vst.msk [vmem:[#allocation0] sm:$0x1] %vm170, %v169
    %s172 = scalar_lea.vmem %s0, 120
    %v173 = vld [vmem:[%s172] sm:$0x1]
    %174 = vrot.lane.b32.xlu0 %v173, 104
    %v175 = vpop.permute.xlu0 %174
    %vm176 = vcmask 876352
    %s177 = scalar_lea.vmem [#allocation0], 16
    %178 = vst.msk [vmem:[%s177] sm:$0x1] %vm176, %v175
    %s179 = scalar_lea.vmem %s0, 77
    %v180 = vld [vmem:[%s179] sm:$0x1]
    %181 = vrot.lane.b32.xlu0 %v180, 103
    %v182 = vpop.permute.xlu0 %181
    %vm183 = vcmask 868152
    %s184 = scalar_lea.vmem [#allocation0], 8
    %185 = vst.msk [vmem:[%s184] sm:$0x1] %vm183, %v182
    %s186 = scalar_lea.vmem %s0, 34
    %v187 = vld [vmem:[%s186] sm:$0x1]
    %188 = vrot.lane.b32.xlu0 %v187, 102
    %v189 = vpop.permute.xlu0 %188
    %vm190 = vcmask 859952
    %191 = vst.msk [vmem:[#allocation0] sm:$0x1] %vm190, %v189
    %s192 = scalar_lea.vmem %s0, 119
    %v193 = vld [vmem:[%s192] sm:$0x1]
    %194 = vrot.lane.b32.xlu0 %v193, 101
    %v195 = vpop.permute.xlu0 %194
    %vm196 = vcmask 851752
    %s197 = scalar_lea.vmem [#allocation0], 16
    %198 = vst.msk [vmem:[%s197] sm:$0x1] %vm196, %v195
    %s199 = scalar_lea.vmem %s0, 76
    %v200 = vld [vmem:[%s199] sm:$0x1]
    %201 = vrot.lane.b32.xlu0 %v200, 100
    %v202 = vpop.permute.xlu0 %201
    %vm203 = vcmask 843552
    %s204 = scalar_lea.vmem [#allocation0], 8
    %205 = vst.msk [vmem:[%s204] sm:$0x1] %vm203, %v202
    %s206 = scalar_lea.vmem %s0, 33
    %v207 = vld [vmem:[%s206] sm:$0x1]
    %208 = vrot.lane.b32.xlu0 %v207, 99
    %v209 = vpop.permute.xlu0 %208
    %vm210 = vcmask 835352
    %211 = vst.msk [vmem:[#allocation0] sm:$0x1] %vm210, %v209
    %s212 = scalar_lea.vmem %s0, 118
    %v213 = vld [vmem:[%s212] sm:$0x1]
    %214 = vrot.lane.b32.xlu0 %v213, 98
    %v215 = vpop.permute.xlu0 %214
    %vm216 = vcmask 827152
    %s217 = scalar_lea.vmem [#allocation0], 16
    %218 = vst.msk [vmem:[%s217] sm:$0x1] %vm216, %v215
    %s219 = scalar_lea.vmem %s0, 75
    %v220 = vld [vmem:[%s219] sm:$0x1]
    %221 = vrot.lane.b32.xlu0 %v220, 97
    %v222 = vpop.permute.xlu0 %221
    %vm223 = vcmask 818952
    %s224 = scalar_lea.vmem [#allocation0], 8
    %225 = vst.msk [vmem:[%s224] sm:$0x1] %vm223, %v222
    %s226 = scalar_lea.vmem %s0, 32
    %v227 = vld [vmem:[%s226] sm:$0x1]
    %228 = vrot.lane.b32.xlu0 %v227, 96
    %v229 = vpop.permute.xlu0 %228
    %vm230 = vcmask 810752
    %231 = vst.msk [vmem:[#allocation0] sm:$0x1] %vm230, %v229
    %s232 = scalar_lea.vmem %s0, 117
    %v233 = vld [vmem:[%s232] sm:$0x1]
    %234 = vrot.lane.b32.xlu0 %v233, 95
    %v235 = vpop.permute.xlu0 %234
    %vm236 = vcmask 802552
    %s237 = scalar_lea.vmem [#allocation0], 16
    %238 = vst.msk [vmem:[%s237] sm:$0x1] %vm236, %v235
    %s239 = scalar_lea.vmem %s0, 74
    %v240 = vld [vmem:[%s239] sm:$0x1]
    %241 = vrot.lane.b32.xlu0 %v240, 94
    %v242 = vpop.permute.xlu0 %241
    %vm243 = vcmask 794352
    %s244 = scalar_lea.vmem [#allocation0], 8
    %245 = vst.msk [vmem:[%s244] sm:$0x1] %vm243, %v242
    %s246 = scalar_lea.vmem %s0, 31
    %v247 = vld [vmem:[%s246] sm:$0x1]
    %248 = vrot.lane.b32.xlu0 %v247, 93
    %v249 = vpop.permute.xlu0 %248
    %vm250 = vcmask 786152
    %251 = vst.msk [vmem:[#allocation0] sm:$0x1] %vm250, %v249
    %s252 = scalar_lea.vmem %s0, 116
    %v253 = vld [vmem:[%s252] sm:$0x1]
    %254 = vrot.lane.b32.xlu0 %v253, 92
    %v255 = vpop.permute.xlu0 %254
    %vm256 = vcmask 777952
    %s257 = scalar_lea.vmem [#allocation0], 16
    %258 = vst.msk [vmem:[%s257] sm:$0x1] %vm256, %v255
    %s259 = scalar_lea.vmem %s0, 73
    %v260 = vld [vmem:[%s259] sm:$0x1]
    %261 = vrot.lane.b32.xlu0 %v260, 91
    %v262 = vpop.permute.xlu0 %261
    %vm263 = vcmask 769752
    %s264 = scalar_lea.vmem [#allocation0], 8
    %265 = vst.msk [vmem:[%s264] sm:$0x1] %vm263, %v262
    %s266 = scalar_lea.vmem %s0, 30
    %v267 = vld [vmem:[%s266] sm:$0x1]
    %268 = vrot.lane.b32.xlu0 %v267, 90
    %v269 = vpop.permute.xlu0 %268
    %vm270 = vcmask 761552
    %271 = vst.msk [vmem:[#allocation0] sm:$0x1] %vm270, %v269
    %s272 = scalar_lea.vmem %s0, 115
    %v273 = vld [vmem:[%s272] sm:$0x1]
    %274 = vrot.lane.b32.xlu0 %v273, 89
    %v275 = vpop.permute.xlu0 %274
    %vm276 = vcmask 753352
    %s277 = scalar_lea.vmem [#allocation0], 16
    %278 = vst.msk [vmem:[%s277] sm:$0x1] %vm276, %v275
    %s279 = scalar_lea.vmem %s0, 72
    %v280 = vld [vmem:[%s279] sm:$0x1]
    %281 = vrot.lane.b32.xlu0 %v280, 88
    %v282 = vpop.permute.xlu0 %281
    %vm283 = vcmask 745152
    %s284 = scalar_lea.vmem [#allocation0], 8
    %285 = vst.msk [vmem:[%s284] sm:$0x1] %vm283, %v282
    %s286 = scalar_lea.vmem %s0, 29
    %v287 = vld [vmem:[%s286] sm:$0x1]
    %288 = vrot.lane.b32.xlu0 %v287, 87
    %v289 = vpop.permute.xlu0 %288
    %vm290 = vcmask 736952
    %291 = vst.msk [vmem:[#allocation0] sm:$0x1] %vm290, %v289
    %s292 = scalar_lea.vmem %s0, 114
    %v293 = vld [vmem:[%s292] sm:$0x1]
    %294 = vrot.lane.b32.xlu0 %v293, 86
    %v295 = vpop.permute.xlu0 %294
    %vm296 = vcmask 728752
    %s297 = scalar_lea.vmem [#allocation0], 16
    %298 = vst.msk [vmem:[%s297] sm:$0x1] %vm296, %v295
    %s299 = scalar_lea.vmem %s0, 71
    %v300 = vld [vmem:[%s299] sm:$0x1]
    %301 = vrot.lane.b32.xlu0 %v300, 85
    %v302 = vpop.permute.xlu0 %301
    %vm303 = vcmask 720552
    %s304 = scalar_lea.vmem [#allocation0], 8
    %305 = vst.msk [vmem:[%s304] sm:$0x1] %vm303, %v302
    %s306 = scalar_lea.vmem %s0, 28
    %v307 = vld [vmem:[%s306] sm:$0x1]
    %308 = vrot.lane.b32.xlu0 %v307, 84
    %v309 = vpop.permute.xlu0 %308
    %vm310 = vcmask 712352
    %311 = vst.msk [vmem:[#allocation0] sm:$0x1] %vm310, %v309
    %s312 = scalar_lea.vmem %s0, 113
    %v313 = vld [vmem:[%s312] sm:$0x1]
    %314 = vrot.lane.b32.xlu0 %v313, 83
    %v315 = vpop.permute.xlu0 %314
    %vm316 = vcmask 704152
    %s317 = scalar_lea.vmem [#allocation0], 16
    %318 = vst.msk [vmem:[%s317] sm:$0x1] %vm316, %v315
    %s319 = scalar_lea.vmem %s0, 70
    %v320 = vld [vmem:[%s319] sm:$0x1]
    %321 = vrot.lane.b32.xlu0 %v320, 82
    %v322 = vpop.permute.xlu0 %321
    %vm323 = vcmask 695952
    %s324 = scalar_lea.vmem [#allocation0], 8
    %325 = vst.msk [vmem:[%s324] sm:$0x1] %vm323, %v322
    %s326 = scalar_lea.vmem %s0, 27
    %v327 = vld [vmem:[%s326] sm:$0x1]
    %328 = vrot.lane.b32.xlu0 %v327, 81
    %v329 = vpop.permute.xlu0 %328
    %vm330 = vcmask 687752
    %331 = vst.msk [vmem:[#allocation0] sm:$0x1] %vm330, %v329
    %s332 = scalar_lea.vmem %s0, 112
    %v333 = vld [vmem:[%s332] sm:$0x1]
    %334 = vrot.lane.b32.xlu0 %v333, 80
    %v335 = vpop.permute.xlu0 %334
    %vm336 = vcmask 679552
    %s337 = scalar_lea.vmem [#allocation0], 16
    %338 = vst.msk [vmem:[%s337] sm:$0x1] %vm336, %v335
    %s339 = scalar_lea.vmem %s0, 69
    %v340 = vld [vmem:[%s339] sm:$0x1]
    %341 = vrot.lane.b32.xlu0 %v340, 79
    %v342 = vpop.permute.xlu0 %341
    %vm343 = vcmask 671352
    %s344 = scalar_lea.vmem [#allocation0], 8
    %345 = vst.msk [vmem:[%s344] sm:$0x1] %vm343, %v342
    %s346 = scalar_lea.vmem %s0, 26
    %v347 = vld [vmem:[%s346] sm:$0x1]
    %348 = vrot.lane.b32.xlu0 %v347, 78
    %v349 = vpop.permute.xlu0 %348
    %vm350 = vcmask 663152
    %351 = vst.msk [vmem:[#allocation0] sm:$0x1] %vm350, %v349
    %s352 = scalar_lea.vmem %s0, 111
    %v353 = vld [vmem:[%s352] sm:$0x1]
    %354 = vrot.lane.b32.xlu0 %v353, 77
    %v355 = vpop.permute.xlu0 %354
    %vm356 = vcmask 654952
    %s357 = scalar_lea.vmem [#allocation0], 16
    %358 = vst.msk [vmem:[%s357] sm:$0x1] %vm356, %v355
    %s359 = scalar_lea.vmem %s0, 68
    %v360 = vld [vmem:[%s359] sm:$0x1]
    %361 = vrot.lane.b32.xlu0 %v360, 76
    %v362 = vpop.permute.xlu0 %361
    %vm363 = vcmask 646752
    %s364 = scalar_lea.vmem [#allocation0], 8
    %365 = vst.msk [vmem:[%s364] sm:$0x1] %vm363, %v362
    %s366 = scalar_lea.vmem %s0, 25
    %v367 = vld [vmem:[%s366] sm:$0x1]
    %368 = vrot.lane.b32.xlu0 %v367, 75
    %v369 = vpop.permute.xlu0 %368
    %vm370 = vcmask 638552
    %371 = vst.msk [vmem:[#allocation0] sm:$0x1] %vm370, %v369
    %s372 = scalar_lea.vmem %s0, 110
    %v373 = vld [vmem:[%s372] sm:$0x1]
    %374 = vrot.lane.b32.xlu0 %v373, 74
    %v375 = vpop.permute.xlu0 %374
    %vm376 = vcmask 630352
    %s377 = scalar_lea.vmem [#allocation0], 16
    %378 = vst.msk [vmem:[%s377] sm:$0x1] %vm376, %v375
    %s379 = scalar_lea.vmem %s0, 67
    %v380 = vld [vmem:[%s379] sm:$0x1]
    %381 = vrot.lane.b32.xlu0 %v380, 73
    %v382 = vpop.permute.xlu0 %381
    %vm383 = vcmask 622152
    %s384 = scalar_lea.vmem [#allocation0], 8
    %385 = vst.msk [vmem:[%s384] sm:$0x1] %vm383, %v382
    %s386 = scalar_lea.vmem %s0, 24
    %v387 = vld [vmem:[%s386] sm:$0x1]
    %388 = vrot.lane.b32.xlu0 %v387, 72
    %v389 = vpop.permute.xlu0 %388
    %vm390 = vcmask 613952
    %391 = vst.msk [vmem:[#allocation0] sm:$0x1] %vm390, %v389
    %s392 = scalar_lea.vmem %s0, 109
    %v393 = vld [vmem:[%s392] sm:$0x1]
    %394 = vrot.lane.b32.xlu0 %v393, 71
    %v395 = vpop.permute.xlu0 %394
    %vm396 = vcmask 605752
    %s397 = scalar_lea.vmem [#allocation0], 16
    %398 = vst.msk [vmem:[%s397] sm:$0x1] %vm396, %v395
    %s399 = scalar_lea.vmem %s0, 66
    %v400 = vld [vmem:[%s399] sm:$0x1]
    %401 = vrot.lane.b32.xlu0 %v400, 70
    %v402 = vpop.permute.xlu0 %401
    %vm403 = vcmask 597552
    %s404 = scalar_lea.vmem [#allocation0], 8
    %405 = vst.msk [vmem:[%s404] sm:$0x1] %vm403, %v402
    %s406 = scalar_lea.vmem %s0, 23
    %v407 = vld [vmem:[%s406] sm:$0x1]
    %408 = vrot.lane.b32.xlu0 %v407, 69
    %v409 = vpop.permute.xlu0 %408
    %vm410 = vcmask 589352
    %411 = vst.msk [vmem:[#allocation0] sm:$0x1] %vm410, %v409
    %s412 = scalar_lea.vmem %s0, 108
    %v413 = vld [vmem:[%s412] sm:$0x1]
    %414 = vrot.lane.b32.xlu0 %v413, 68
    %v415 = vpop.permute.xlu0 %414
    %vm416 = vcmask 581152
    %s417 = scalar_lea.vmem [#allocation0], 16
    %418 = vst.msk [vmem:[%s417] sm:$0x1] %vm416, %v415
    %s419 = scalar_lea.vmem %s0, 65
    %v420 = vld [vmem:[%s419] sm:$0x1]
    %421 = vrot.lane.b32.xlu0 %v420, 67
    %v422 = vpop.permute.xlu0 %421
    %vm423 = vcmask 572952
    %s424 = scalar_lea.vmem [#allocation0], 8
    %425 = vst.msk [vmem:[%s424] sm:$0x1] %vm423, %v422
    %s426 = scalar_lea.vmem %s0, 22
    %v427 = vld [vmem:[%s426] sm:$0x1]
    %428 = vrot.lane.b32.xlu0 %v427, 66
    %v429 = vpop.permute.xlu0 %428
    %vm430 = vcmask 564752
    %431 = vst.msk [vmem:[#allocation0] sm:$0x1] %vm430, %v429
    %s432 = scalar_lea.vmem %s0, 107
    %v433 = vld [vmem:[%s432] sm:$0x1]
    %434 = vrot.lane.b32.xlu0 %v433, 65
    %v435 = vpop.permute.xlu0 %434
    %vm436 = vcmask 556552
    %s437 = scalar_lea.vmem [#allocation0], 16
    %438 = vst.msk [vmem:[%s437] sm:$0x1] %vm436, %v435
    %s439 = scalar_lea.vmem %s0, 64
    %v440 = vld [vmem:[%s439] sm:$0x1]
    %441 = vrot.lane.b32.xlu0 %v440, 64
    %v442 = vpop.permute.xlu0 %441
    %vm443 = vcmask 548352
    %s444 = scalar_lea.vmem [#allocation0], 8
    %445 = vst.msk [vmem:[%s444] sm:$0x1] %vm443, %v442
    %s446 = scalar_lea.vmem %s0, 21
    %v447 = vld [vmem:[%s446] sm:$0x1]
    %448 = vrot.lane.b32.xlu0 %v447, 63
    %v449 = vpop.permute.xlu0 %448
    %vm450 = vcmask 540152
    %451 = vst.msk [vmem:[#allocation0] sm:$0x1] %vm450, %v449
    %s452 = scalar_lea.vmem %s0, 106
    %v453 = vld [vmem:[%s452] sm:$0x1]
    %454 = vrot.lane.b32.xlu0 %v453, 62
    %v455 = vpop.permute.xlu0 %454
    %vm456 = vcmask 531952
    %s457 = scalar_lea.vmem [#allocation0], 16
    %458 = vst.msk [vmem:[%s457] sm:$0x1] %vm456, %v455
    %s459 = scalar_lea.vmem %s0, 63
    %v460 = vld [vmem:[%s459] sm:$0x1]
    %461 = vrot.lane.b32.xlu0 %v460, 61
    %v462 = vpop.permute.xlu0 %461
    %vm463 = vcmask 523752
    %s464 = scalar_lea.vmem [#allocation0], 8
    %465 = vst.msk [vmem:[%s464] sm:$0x1] %vm463, %v462
    %s466 = scalar_lea.vmem %s0, 20
    %v467 = vld [vmem:[%s466] sm:$0x1]
    %468 = vrot.lane.b32.xlu0 %v467, 60
    %v469 = vpop.permute.xlu0 %468
    %vm470 = vcmask 515552
    %471 = vst.msk [vmem:[#allocation0] sm:$0x1] %vm470, %v469
    %s472 = scalar_lea.vmem %s0, 105
    %v473 = vld [vmem:[%s472] sm:$0x1]
    %474 = vrot.lane.b32.xlu0 %v473, 59
    %v475 = vpop.permute.xlu0 %474
    %vm476 = vcmask 507352
    %s477 = scalar_lea.vmem [#allocation0], 16
    %478 = vst.msk [vmem:[%s477] sm:$0x1] %vm476, %v475
    %s479 = scalar_lea.vmem %s0, 62
    %v480 = vld [vmem:[%s479] sm:$0x1]
    %481 = vrot.lane.b32.xlu0 %v480, 58
    %v482 = vpop.permute.xlu0 %481
    %vm483 = vcmask 499152
    %s484 = scalar_lea.vmem [#allocation0], 8
    %485 = vst.msk [vmem:[%s484] sm:$0x1] %vm483, %v482
    %s486 = scalar_lea.vmem %s0, 19
    %v487 = vld [vmem:[%s486] sm:$0x1]
    %488 = vrot.lane.b32.xlu0 %v487, 57
    %v489 = vpop.permute.xlu0 %488
    %vm490 = vcmask 490952
    %491 = vst.msk [vmem:[#allocation0] sm:$0x1] %vm490, %v489
    %s492 = scalar_lea.vmem %s0, 104
    %v493 = vld [vmem:[%s492] sm:$0x1]
    %494 = vrot.lane.b32.xlu0 %v493, 56
    %v495 = vpop.permute.xlu0 %494
    %vm496 = vcmask 482752
    %s497 = scalar_lea.vmem [#allocation0], 16
    %498 = vst.msk [vmem:[%s497] sm:$0x1] %vm496, %v495
    %s499 = scalar_lea.vmem %s0, 61
    %v500 = vld [vmem:[%s499] sm:$0x1]
    %501 = vrot.lane.b32.xlu0 %v500, 55
    %v502 = vpop.permute.xlu0 %501
    %vm503 = vcmask 474552
    %s504 = scalar_lea.vmem [#allocation0], 8
    %505 = vst.msk [vmem:[%s504] sm:$0x1] %vm503, %v502
    %s506 = scalar_lea.vmem %s0, 18
    %v507 = vld [vmem:[%s506] sm:$0x1]
    %508 = vrot.lane.b32.xlu0 %v507, 54
    %v509 = vpop.permute.xlu0 %508
    %vm510 = vcmask 466352
    %511 = vst.msk [vmem:[#allocation0] sm:$0x1] %vm510, %v509
    %s512 = scalar_lea.vmem %s0, 103
    %v513 = vld [vmem:[%s512] sm:$0x1]
    %514 = vrot.lane.b32.xlu0 %v513, 53
    %v515 = vpop.permute.xlu0 %514
    %vm516 = vcmask 458152
    %s517 = scalar_lea.vmem [#allocation0], 16
    %518 = vst.msk [vmem:[%s517] sm:$0x1] %vm516, %v515
    %s519 = scalar_lea.vmem %s0, 60
    %v520 = vld [vmem:[%s519] sm:$0x1]
    %521 = vrot.lane.b32.xlu0 %v520, 52
    %v522 = vpop.permute.xlu0 %521
    %vm523 = vcmask 449952
    %s524 = scalar_lea.vmem [#allocation0], 8
    %525 = vst.msk [vmem:[%s524] sm:$0x1] %vm523, %v522
    %s526 = scalar_lea.vmem %s0, 17
    %v527 = vld [vmem:[%s526] sm:$0x1]
    %528 = vrot.lane.b32.xlu0 %v527, 51
    %v529 = vpop.permute.xlu0 %528
    %vm530 = vcmask 441752
    %531 = vst.msk [vmem:[#allocation0] sm:$0x1] %vm530, %v529
    %s532 = scalar_lea.vmem %s0, 102
    %v533 = vld [vmem:[%s532] sm:$0x1]
    %534 = vrot.lane.b32.xlu0 %v533, 50
    %v535 = vpop.permute.xlu0 %534
    %vm536 = vcmask 433552
    %s537 = scalar_lea.vmem [#allocation0], 16
    %538 = vst.msk [vmem:[%s537] sm:$0x1] %vm536, %v535
    %s539 = scalar_lea.vmem %s0, 59
    %v540 = vld [vmem:[%s539] sm:$0x1]
    %541 = vrot.lane.b32.xlu0 %v540, 49
    %v542 = vpop.permute.xlu0 %541
    %vm543 = vcmask 425352
    %s544 = scalar_lea.vmem [#allocation0], 8
    %545 = vst.msk [vmem:[%s544] sm:$0x1] %vm543, %v542
    %s546 = scalar_lea.vmem %s0, 16
    %v547 = vld [vmem:[%s546] sm:$0x1]
    %548 = vrot.lane.b32.xlu0 %v547, 48
    %v549 = vpop.permute.xlu0 %548
    %vm550 = vcmask 417152
    %551 = vst.msk [vmem:[#allocation0] sm:$0x1] %vm550, %v549
    %s552 = scalar_lea.vmem %s0, 101
    %v553 = vld [vmem:[%s552] sm:$0x1]
    %554 = vrot.lane.b32.xlu0 %v553, 47
    %v555 = vpop.permute.xlu0 %554
    %vm556 = vcmask 408952
    %s557 = scalar_lea.vmem [#allocation0], 16
    %558 = vst.msk [vmem:[%s557] sm:$0x1] %vm556, %v555
    %s559 = scalar_lea.vmem %s0, 58
    %v560 = vld [vmem:[%s559] sm:$0x1]
    %561 = vrot.lane.b32.xlu0 %v560, 46
    %v562 = vpop.permute.xlu0 %561
    %vm563 = vcmask 400752
    %s564 = scalar_lea.vmem [#allocation0], 8
    %565 = vst.msk [vmem:[%s564] sm:$0x1] %vm563, %v562
    %s566 = scalar_lea.vmem %s0, 15
    %v567 = vld [vmem:[%s566] sm:$0x1]
    %568 = vrot.lane.b32.xlu0 %v567, 45
    %v569 = vpop.permute.xlu0 %568
    %vm570 = vcmask 392552
    %571 = vst.msk [vmem:[#allocation0] sm:$0x1] %vm570, %v569
    %s572 = scalar_lea.vmem %s0, 100
    %v573 = vld [vmem:[%s572] sm:$0x1]
    %574 = vrot.lane.b32.xlu0 %v573, 44
    %v575 = vpop.permute.xlu0 %574
    %vm576 = vcmask 384352
    %s577 = scalar_lea.vmem [#allocation0], 16
    %578 = vst.msk [vmem:[%s577] sm:$0x1] %vm576, %v575
    %s579 = scalar_lea.vmem %s0, 57
    %v580 = vld [vmem:[%s579] sm:$0x1]
    %581 = vrot.lane.b32.xlu0 %v580, 43
    %v582 = vpop.permute.xlu0 %581
    %vm583 = vcmask 376152
    %s584 = scalar_lea.vmem [#allocation0], 8
    %585 = vst.msk [vmem:[%s584] sm:$0x1] %vm583, %v582
    %s586 = scalar_lea.vmem %s0, 14
    %v587 = vld [vmem:[%s586] sm:$0x1]
    %588 = vrot.lane.b32.xlu0 %v587, 42
    %v589 = vpop.permute.xlu0 %588
    %vm590 = vcmask 367952
    %591 = vst.msk [vmem:[#allocation0] sm:$0x1] %vm590, %v589
    %s592 = scalar_lea.vmem %s0, 99
    %v593 = vld [vmem:[%s592] sm:$0x1]
    %594 = vrot.lane.b32.xlu0 %v593, 41
    %v595 = vpop.permute.xlu0 %594
    %vm596 = vcmask 359752
    %s597 = scalar_lea.vmem [#allocation0], 16
    %598 = vst.msk [vmem:[%s597] sm:$0x1] %vm596, %v595
    %s599 = scalar_lea.vmem %s0, 56
    %v600 = vld [vmem:[%s599] sm:$0x1]
    %601 = vrot.lane.b32.xlu0 %v600, 40
    %v602 = vpop.permute.xlu0 %601
    %vm603 = vcmask 351552
    %s604 = scalar_lea.vmem [#allocation0], 8
    %605 = vst.msk [vmem:[%s604] sm:$0x1] %vm603, %v602
    %s606 = scalar_lea.vmem %s0, 13
    %v607 = vld [vmem:[%s606] sm:$0x1]
    %608 = vrot.lane.b32.xlu0 %v607, 39
    %v609 = vpop.permute.xlu0 %608
    %vm610 = vcmask 343352
    %611 = vst.msk [vmem:[#allocation0] sm:$0x1] %vm610, %v609
    %s612 = scalar_lea.vmem %s0, 98
    %v613 = vld [vmem:[%s612] sm:$0x1]
    %614 = vrot.lane.b32.xlu0 %v613, 38
    %v615 = vpop.permute.xlu0 %614
    %vm616 = vcmask 335152
    %s617 = scalar_lea.vmem [#allocation0], 16
    %618 = vst.msk [vmem:[%s617] sm:$0x1] %vm616, %v615
    %s619 = scalar_lea.vmem %s0, 55
    %v620 = vld [vmem:[%s619] sm:$0x1]
    %621 = vrot.lane.b32.xlu0 %v620, 37
    %v622 = vpop.permute.xlu0 %621
    %vm623 = vcmask 326952
    %s624 = scalar_lea.vmem [#allocation0], 8
    %625 = vst.msk [vmem:[%s624] sm:$0x1] %vm623, %v622
    %s626 = scalar_lea.vmem %s0, 12
    %v627 = vld [vmem:[%s626] sm:$0x1]
    %628 = vrot.lane.b32.xlu0 %v627, 36
    %v629 = vpop.permute.xlu0 %628
    %vm630 = vcmask 318752
    %631 = vst.msk [vmem:[#allocation0] sm:$0x1] %vm630, %v629
    %s632 = scalar_lea.vmem %s0, 97
    %v633 = vld [vmem:[%s632] sm:$0x1]
    %634 = vrot.lane.b32.xlu0 %v633, 35
    %v635 = vpop.permute.xlu0 %634
    %vm636 = vcmask 310552
    %s637 = scalar_lea.vmem [#allocation0], 16
    %638 = vst.msk [vmem:[%s637] sm:$0x1] %vm636, %v635
    %s639 = scalar_lea.vmem %s0, 54
    %v640 = vld [vmem:[%s639] sm:$0x1]
    %641 = vrot.lane.b32.xlu0 %v640, 34
    %v642 = vpop.permute.xlu0 %641
    %vm643 = vcmask 302352
    %s644 = scalar_lea.vmem [#allocation0], 8
    %645 = vst.msk [vmem:[%s644] sm:$0x1] %vm643, %v642
    %s646 = scalar_lea.vmem %s0, 11
    %v647 = vld [vmem:[%s646] sm:$0x1]
    %648 = vrot.lane.b32.xlu0 %v647, 33
    %v649 = vpop.permute.xlu0 %648
    %vm650 = vcmask 294152
    %651 = vst.msk [vmem:[#allocation0] sm:$0x1] %vm650, %v649
    %s652 = scalar_lea.vmem %s0, 96
    %v653 = vld [vmem:[%s652] sm:$0x1]
    %654 = vrot.lane.b32.xlu0 %v653, 32
    %v655 = vpop.permute.xlu0 %654
    %vm656 = vcmask 285952
    %s657 = scalar_lea.vmem [#allocation0], 16
    %658 = vst.msk [vmem:[%s657] sm:$0x1] %vm656, %v655
    %s659 = scalar_lea.vmem %s0, 53
    %v660 = vld [vmem:[%s659] sm:$0x1]
    %661 = vrot.lane.b32.xlu0 %v660, 31
    %v662 = vpop.permute.xlu0 %661
    %vm663 = vcmask 277752
    %s664 = scalar_lea.vmem [#allocation0], 8
    %665 = vst.msk [vmem:[%s664] sm:$0x1] %vm663, %v662
    %s666 = scalar_lea.vmem %s0, 10
    %v667 = vld [vmem:[%s666] sm:$0x1]
    %668 = vrot.lane.b32.xlu0 %v667, 30
    %v669 = vpop.permute.xlu0 %668
    %vm670 = vcmask 269552
    %671 = vst.msk [vmem:[#allocation0] sm:$0x1] %vm670, %v669
    %s672 = scalar_lea.vmem %s0, 95
    %v673 = vld [vmem:[%s672] sm:$0x1]
    %674 = vrot.lane.b32.xlu0 %v673, 29
    %v675 = vpop.permute.xlu0 %674
    %vm676 = vcmask 261352
    %s677 = scalar_lea.vmem [#allocation0], 16
    %678 = vst.msk [vmem:[%s677] sm:$0x1] %vm676, %v675
    %s679 = scalar_lea.vmem %s0, 52
    %v680 = vld [vmem:[%s679] sm:$0x1]
    %681 = vrot.lane.b32.xlu0 %v680, 28
    %v682 = vpop.permute.xlu0 %681
    %vm683 = vcmask 253152
    %s684 = scalar_lea.vmem [#allocation0], 8
    %685 = vst.msk [vmem:[%s684] sm:$0x1] %vm683, %v682
    %s686 = scalar_lea.vmem %s0, 9
    %v687 = vld [vmem:[%s686] sm:$0x1]
    %688 = vrot.lane.b32.xlu0 %v687, 27
    %v689 = vpop.permute.xlu0 %688
    %vm690 = vcmask 244952
    %691 = vst.msk [vmem:[#allocation0] sm:$0x1] %vm690, %v689
    %s692 = scalar_lea.vmem %s0, 94
    %v693 = vld [vmem:[%s692] sm:$0x1]
    %694 = vrot.lane.b32.xlu0 %v693, 26
    %v695 = vpop.permute.xlu0 %694
    %vm696 = vcmask 236752
    %s697 = scalar_lea.vmem [#allocation0], 16
    %698 = vst.msk [vmem:[%s697] sm:$0x1] %vm696, %v695
    %s699 = scalar_lea.vmem %s0, 51
    %v700 = vld [vmem:[%s699] sm:$0x1]
    %701 = vrot.lane.b32.xlu0 %v700, 25
    %v702 = vpop.permute.xlu0 %701
    %vm703 = vcmask 228552
    %s704 = scalar_lea.vmem [#allocation0], 8
    %705 = vst.msk [vmem:[%s704] sm:$0x1] %vm703, %v702
    %s706 = scalar_lea.vmem %s0, 8
    %v707 = vld [vmem:[%s706] sm:$0x1]
    %708 = vrot.lane.b32.xlu0 %v707, 24
    %v709 = vpop.permute.xlu0 %708
    %vm710 = vcmask 220352
    %711 = vst.msk [vmem:[#allocation0] sm:$0x1] %vm710, %v709
    %s712 = scalar_lea.vmem %s0, 93
    %v713 = vld [vmem:[%s712] sm:$0x1]
    %714 = vrot.lane.b32.xlu0 %v713, 23
    %v715 = vpop.permute.xlu0 %714
    %vm716 = vcmask 212152
    %s717 = scalar_lea.vmem [#allocation0], 16
    %718 = vst.msk [vmem:[%s717] sm:$0x1] %vm716, %v715
    %s719 = scalar_lea.vmem %s0, 50
    %v720 = vld [vmem:[%s719] sm:$0x1]
    %721 = vrot.lane.b32.xlu0 %v720, 22
    %v722 = vpop.permute.xlu0 %721
    %vm723 = vcmask 203952
    %s724 = scalar_lea.vmem [#allocation0], 8
    %725 = vst.msk [vmem:[%s724] sm:$0x1] %vm723, %v722
    %s726 = scalar_lea.vmem %s0, 7
    %v727 = vld [vmem:[%s726] sm:$0x1]
    %728 = vrot.lane.b32.xlu0 %v727, 21
    %v729 = vpop.permute.xlu0 %728
    %vm730 = vcmask 195752
    %731 = vst.msk [vmem:[#allocation0] sm:$0x1] %vm730, %v729
    %s732 = scalar_lea.vmem %s0, 92
    %v733 = vld [vmem:[%s732] sm:$0x1]
    %734 = vrot.lane.b32.xlu0 %v733, 20
    %v735 = vpop.permute.xlu0 %734
    %vm736 = vcmask 187552
    %s737 = scalar_lea.vmem [#allocation0], 16
    %738 = vst.msk [vmem:[%s737] sm:$0x1] %vm736, %v735
    %s739 = scalar_lea.vmem %s0, 49
    %v740 = vld [vmem:[%s739] sm:$0x1]
    %741 = vrot.lane.b32.xlu0 %v740, 19
    %v742 = vpop.permute.xlu0 %741
    %vm743 = vcmask 179352
    %s744 = scalar_lea.vmem [#allocation0], 8
    %745 = vst.msk [vmem:[%s744] sm:$0x1] %vm743, %v742
    %s746 = scalar_lea.vmem %s0, 6
    %v747 = vld [vmem:[%s746] sm:$0x1]
    %748 = vrot.lane.b32.xlu0 %v747, 18
    %v749 = vpop.permute.xlu0 %748
    %vm750 = vcmask 171152
    %751 = vst.msk [vmem:[#allocation0] sm:$0x1] %vm750, %v749
    %s752 = scalar_lea.vmem %s0, 91
    %v753 = vld [vmem:[%s752] sm:$0x1]
    %754 = vrot.lane.b32.xlu0 %v753, 17
    %v755 = vpop.permute.xlu0 %754
    %vm756 = vcmask 162952
    %s757 = scalar_lea.vmem [#allocation0], 16
    %758 = vst.msk [vmem:[%s757] sm:$0x1] %vm756, %v755
    %s759 = scalar_lea.vmem %s0, 48
    %v760 = vld [vmem:[%s759] sm:$0x1]
    %761 = vrot.lane.b32.xlu0 %v760, 16
    %v762 = vpop.permute.xlu0 %761
    %vm763 = vcmask 154752
    %s764 = scalar_lea.vmem [#allocation0], 8
    %765 = vst.msk [vmem:[%s764] sm:$0x1] %vm763, %v762
    %s766 = scalar_lea.vmem %s0, 5
    %v767 = vld [vmem:[%s766] sm:$0x1]
    %768 = vrot.lane.b32.xlu0 %v767, 15
    %v769 = vpop.permute.xlu0 %768
    %vm770 = vcmask 146552
    %771 = vst.msk [vmem:[#allocation0] sm:$0x1] %vm770, %v769
    %s772 = scalar_lea.vmem %s0, 90
    %v773 = vld [vmem:[%s772] sm:$0x1]
    %774 = vrot.lane.b32.xlu0 %v773, 14
    %v775 = vpop.permute.xlu0 %774
    %vm776 = vcmask 138352
    %s777 = scalar_lea.vmem [#allocation0], 16
    %778 = vst.msk [vmem:[%s777] sm:$0x1] %vm776, %v775
    %s779 = scalar_lea.vmem %s0, 47
    %v780 = vld [vmem:[%s779] sm:$0x1]
    %781 = vrot.lane.b32.xlu0 %v780, 13
    %v782 = vpop.permute.xlu0 %781
    %vm783 = vcmask 130152
    %s784 = scalar_lea.vmem [#allocation0], 8
    %785 = vst.msk [vmem:[%s784] sm:$0x1] %vm783, %v782
    %s786 = scalar_lea.vmem %s0, 4
    %v787 = vld [vmem:[%s786] sm:$0x1]
    %788 = vrot.lane.b32.xlu0 %v787, 12
    %v789 = vpop.permute.xlu0 %788
    %vm790 = vcmask 121952
    %791 = vst.msk [vmem:[#allocation0] sm:$0x1] %vm790, %v789
    %s792 = scalar_lea.vmem %s0, 89
    %v793 = vld [vmem:[%s792] sm:$0x1]
    %794 = vrot.lane.b32.xlu0 %v793, 11
    %v795 = vpop.permute.xlu0 %794
    %vm796 = vcmask 113752
    %s797 = scalar_lea.vmem [#allocation0], 16
    %798 = vst.msk [vmem:[%s797] sm:$0x1] %vm796, %v795
    %s799 = scalar_lea.vmem %s0, 46
    %v800 = vld [vmem:[%s799] sm:$0x1]
    %801 = vrot.lane.b32.xlu0 %v800, 10
    %v802 = vpop.permute.xlu0 %801
    %vm803 = vcmask 105552
    %s804 = scalar_lea.vmem [#allocation0], 8
    %805 = vst.msk [vmem:[%s804] sm:$0x1] %vm803, %v802
    %s806 = scalar_lea.vmem %s0, 3
    %v807 = vld [vmem:[%s806] sm:$0x1]
    %808 = vrot.lane.b32.xlu0 %v807, 9
    %v809 = vpop.permute.xlu0 %808
    %vm810 = vcmask 97352
    %811 = vst.msk [vmem:[#allocation0] sm:$0x1] %vm810, %v809
    %s812 = scalar_lea.vmem %s0, 88
    %v813 = vld [vmem:[%s812] sm:$0x1]
    %814 = vrot.lane.b32.xlu0 %v813, 8
    %v815 = vpop.permute.xlu0 %814
    %vm816 = vcmask 89152
    %s817 = scalar_lea.vmem [#allocation0], 16
    %818 = vst.msk [vmem:[%s817] sm:$0x1] %vm816, %v815
    %s819 = scalar_lea.vmem %s0, 45
    %v820 = vld [vmem:[%s819] sm:$0x1]
    %821 = vrot.lane.b32.xlu0 %v820, 7
    %v822 = vpop.permute.xlu0 %821
    %vm823 = vcmask 80952
    %s824 = scalar_lea.vmem [#allocation0], 8
    %825 = vst.msk [vmem:[%s824] sm:$0x1] %vm823, %v822
    %s826 = scalar_lea.vmem %s0, 2
    %v827 = vld [vmem:[%s826] sm:$0x1]
    %828 = vrot.lane.b32.xlu0 %v827, 6
    %v829 = vpop.permute.xlu0 %828
    %vm830 = vcmask 72752
    %831 = vst.msk [vmem:[#allocation0] sm:$0x1] %vm830, %v829
    %s832 = scalar_lea.vmem %s0, 87
    %v833 = vld [vmem:[%s832] sm:$0x1]
    %834 = vrot.lane.b32.xlu0 %v833, 5
    %v835 = vpop.permute.xlu0 %834
    %vm836 = vcmask 64552
    %s837 = scalar_lea.vmem [#allocation0], 16
    %838 = vst.msk [vmem:[%s837] sm:$0x1] %vm836, %v835
    %s839 = scalar_lea.vmem %s0, 44
    %v840 = vld [vmem:[%s839] sm:$0x1]
    %841 = vrot.lane.b32.xlu0 %v840, 4
    %v842 = vpop.permute.xlu0 %841
    %vm843 = vcmask 56352
    %s844 = scalar_lea.vmem [#allocation0], 8
    %845 = vst.msk [vmem:[%s844] sm:$0x1] %vm843, %v842
    %s846 = scalar_lea.vmem %s0, 1
    %v847 = vld [vmem:[%s846] sm:$0x1]
    %848 = vrot.lane.b32.xlu0 %v847, 3
    %v849 = vpop.permute.xlu0 %848
    %vm850 = vcmask 48152
    %851 = vst.msk [vmem:[#allocation0] sm:$0x1] %vm850, %v849
    %s852 = scalar_lea.vmem %s0, 86
    %v853 = vld [vmem:[%s852] sm:$0x1]
    %854 = vrot.lane.b32.xlu0 %v853, 2
    %v855 = vpop.permute.xlu0 %854
    %vm856 = vcmask 39952
    %s857 = scalar_lea.vmem [#allocation0], 16
    %858 = vst.msk [vmem:[%s857] sm:$0x1] %vm856, %v855
    %s859 = scalar_lea.vmem %s0, 43
    %v860 = vld [vmem:[%s859] sm:$0x1]
    %861 = vrot.lane.b32.xlu0 %v860, 1
    %v862 = vpop.permute.xlu0 %861
    %vm863 = vcmask 31752
    %s864 = scalar_lea.vmem [#allocation0], 8
    %865 = vst.msk [vmem:[%s864] sm:$0x1] %vm863, %v862
    %s867 = sshll.u32 1, 1
    %s868 = ssub.s32 %s867, 1
    %v870 = vld [vmem:[#allocation0] sm:%s868]
    %s871 = sshll.u32 1, 1
    %s872 = ssub.s32 %s871, 1
    %873 = vst [vmem:[%s1] sm:%s872] %v870
    %s874 = scalar_lea.vmem [#allocation0], 8
    %v875 = vld [vmem:[%s874] sm:%s868]
    %s876 = sshll.u32 1, 1
    %s877 = ssub.s32 %s876, 1
    %s878 = scalar_lea.vmem %s1, 1
    %879 = vst [vmem:[%s878] sm:%s877] %v875
    %s880 = scalar_lea.vmem [#allocation0], 16
    %v881 = vld [vmem:[%s880] sm:%s868]
    %s882 = sshll.u32 1, 1
    %s883 = ssub.s32 %s882, 1
    %s884 = smul.addr 1, 2
    %s885 = scalar_lea.vmem %s1, %s884
    %886 = vst [vmem:[%s885] sm:%s883] %v881

// kernel: sphere_sdf_distance.1
$region0: #{sphere_sdf_distance.1}
  #allocation0 [shape = 'u32[]', space=smem, size = 0x4, offset = 0x4, fixed_abs, tag = 'smem constant byte address 0x4 - core index']
  #allocation1 [shape = 'u32[144,128]{1,0:T(1,128)}', space=vmem, size = 0x12000, scoped, tag = 'internal scratch']
  #allocation2 [shape = 'f32[1]{0:T(128)S(6)}', space=smem, size = 0x200, scoped, tag = 'scoped memory for sphere_sdf_distance.1']
  %s0 = inlined_call_operand.<no memory space> [shape: f32[1], index: 0, kind: input, shape index: {}]
  %s1 = inlined_call_operand.vmem [shape: f32[8,384], index: 1, kind: input, shape index: {}]
  %s2 = inlined_call_operand.vmem [shape: f32[1,384], index: 2, kind: input, shape index: {}]
  %s3 = inlined_call_operand.vmem [shape: bf16[384,128], index: 3, kind: input, shape index: {}]
  %s4 = inlined_call_operand.hbm [shape: f32[8,128], index: 4, kind: output, shape index: {}]
  %s5 = sld [smem:[#allocation0]]
  $region26: #{sphere_sdf_distance.1} parent=0
    _
  %s7 = ssub.s32 1, %s5
  %s8 = scalar_select 0, %s7, %s5
  %9 = sst [smem:[#allocation2]] %s0
  $region1: #{sphere_sdf_distance.1} parent=0
    #allocation3 [shape = 'u8[4096]{0}', space=vmem, size = 0x1000, scoped, tag = 'output window, operand 0, single buffered']
    #allocation4 [shape = 's32[1]{0}', space=sflag, size = 0x4, scoped, tag = 'scoped memory for sphere_sdf_distance.1']
    %10 = vsyncpa [#allocation4], 0
    // Predicated region
    $region2: #{sphere_sdf_distance.1} parent=1 // pred_check
      _
    $region3: #{sphere_sdf_distance.1} parent=1 // pred_check_branch
      %12 = sbr.rel (0) target = $region5
    $region4: #{sphere_sdf_distance.1} parent=1 // pred_region
      _
    $region5: #{sphere_sdf_distance.1} parent=1 // pred_fallthru
      _
    // Predicated region
    $region6: #{sphere_sdf_distance.1} parent=1 // pred_check
      _
    $region7: #{sphere_sdf_distance.1} parent=1 // pred_check_branch
      %14 = sbr.rel (0) target = $region9
    $region8: #{sphere_sdf_distance.1} parent=1 // pred_region
      _
    $region9: #{sphere_sdf_distance.1} parent=1 // pred_fallthru
      _
    // Predicated region
    $region10: #{sphere_sdf_distance.1} parent=1 // pred_check
      _
    $region11: #{sphere_sdf_distance.1} parent=1 // pred_check_branch
      %16 = sbr.rel (0) target = $region13
    $region12: #{sphere_sdf_distance.1} parent=1 // pred_region
      _
    $region13: #{sphere_sdf_distance.1} parent=1 // pred_fallthru
      _
    // Predicated region
    $region14: #{sphere_sdf_distance.1} parent=1 // pred_check
      _
    $region15: #{sphere_sdf_distance.1} parent=1 // pred_check_branch
      %18 = sbr.rel (0) target = $region17
    $region16: #{sphere_sdf_distance.1} parent=1 // pred_region
      _
    $region17: #{sphere_sdf_distance.1} parent=1 // pred_fallthru
      _
    %v20 = vld [vmem:[%s1] sm:$0xff]
    %v21 = vld [vmem:[%s1 + $0x8] sm:$0xff]
    %v22 = vld [vmem:[%s1 + $0x10] sm:$0xff]
    %v23 = vld [vmem:[%s2] sm:$0x7]
    %v25 = vlaneseq
    %v26 = vshrl.u32 %v25, 7
    %v27 = vsub.s32 0, %v26
    %v28 = vrot.slane %v23, %v27
    %v29 = vlaneseq
    %v30 = vshrl.u32 %v29, 7
    %v31 = vsub.s32 1, %v30
    %v32 = vrot.slane %v23, %v31
    %v33 = vlaneseq
    %v34 = vshrl.u32 %v33, 7
    %v35 = vsub.s32 2, %v34
    %v36 = vrot.slane %v23, %v35
    %v40 = vsub.f32 %v20, %v28
    %v41 = vsub.f32 %v21, %v32
    %v42 = vsub.f32 %v22, %v36
    %v43 = vmul.f32 %v40, %v40
    %v44 = vmul.f32 %v41, %v41
    %v45 = vmul.f32 %v42, %v42
    %v46 = vpack.c.bf16 %v43, %v43
    %v47 = vpack.c.bf16 %v44, %v44
    %v48 = vpack.c.bf16 %v45, %v45
    %v49 = vunpack.c.l.bf16 %v46
    %v50 = vunpack.c.l.bf16 %v47
    %v51 = vunpack.c.l.bf16 %v48
    %v52 = vsub.f32 %v43, %v49
    %v53 = vsub.f32 %v44, %v50
    %v54 = vsub.f32 %v45, %v51
    %v55 = vpack.c.bf16 %v52, %v52
    %v56 = vpack.c.bf16 %v53, %v53
    %v57 = vpack.c.bf16 %v54, %v54
    %v58 = vld [vmem:[%s3] sm:$0xf]
    %v59 = vld [vmem:[%s3 + $0x4] sm:$0xf]
    %v60 = vld [vmem:[%s3 + $0x8] sm:$0xf]
    %v61 = vld [vmem:[%s3 + $0xc] sm:$0xf]
    %v62 = vld [vmem:[%s3 + $0x10] sm:$0xf]
    %v63 = vld [vmem:[%s3 + $0x14] sm:$0xf]
    %v64 = vld [vmem:[%s3 + $0x18] sm:$0xf]
    %v65 = vld [vmem:[%s3 + $0x1c] sm:$0xf]
    %v66 = vld [vmem:[%s3 + $0x20] sm:$0xf]
    %v67 = vld [vmem:[%s3 + $0x24] sm:$0xf]
    %v68 = vld [vmem:[%s3 + $0x28] sm:$0xf]
    %v69 = vld [vmem:[%s3 + $0x2c] sm:$0xf]
    %v70 = vld [vmem:[%s3 + $0x30] sm:$0xf]
    %v71 = vld [vmem:[%s3 + $0x34] sm:$0xf]
    %v72 = vld [vmem:[%s3 + $0x38] sm:$0xf]
    %v73 = vld [vmem:[%s3 + $0x3c] sm:$0xf]
    %v74 = vld [vmem:[%s3 + $0x40] sm:$0xf]
    %v75 = vld [vmem:[%s3 + $0x44] sm:$0xf]
    %v76 = vld [vmem:[%s3 + $0x48] sm:$0xf]
    %v77 = vld [vmem:[%s3 + $0x4c] sm:$0xf]
    %v78 = vld [vmem:[%s3 + $0x50] sm:$0xf]
    %v79 = vld [vmem:[%s3 + $0x54] sm:$0xf]
    %v80 = vld [vmem:[%s3 + $0x58] sm:$0xf]
    %v81 = vld [vmem:[%s3 + $0x5c] sm:$0xf]
    %v82 = vld [vmem:[%s3 + $0x60] sm:$0xf]
    %v83 = vld [vmem:[%s3 + $0x64] sm:$0xf]
    %v84 = vld [vmem:[%s3 + $0x68] sm:$0xf]
    %v85 = vld [vmem:[%s3 + $0x6c] sm:$0xf]
    %v86 = vld [vmem:[%s3 + $0x70] sm:$0xf]
    %v87 = vld [vmem:[%s3 + $0x74] sm:$0xf]
    %v88 = vld [vmem:[%s3 + $0x78] sm:$0xf]
    %v89 = vld [vmem:[%s3 + $0x7c] sm:$0xf]
    %v90 = vld [vmem:[%s3 + $0x80] sm:$0xf]
    %v91 = vld [vmem:[%s3 + $0x84] sm:$0xf]
    %v92 = vld [vmem:[%s3 + $0x88] sm:$0xf]
    %v93 = vld [vmem:[%s3 + $0x8c] sm:$0xf]
    %v94 = vld [vmem:[%s3 + $0x90] sm:$0xf]
    %v95 = vld [vmem:[%s3 + $0x94] sm:$0xf]
    %v96 = vld [vmem:[%s3 + $0x98] sm:$0xf]
    %v97 = vld [vmem:[%s3 + $0x9c] sm:$0xf]
    %v98 = vld [vmem:[%s3 + $0xa0] sm:$0xf]
    %v99 = vld [vmem:[%s3 + $0xa4] sm:$0xf]
    %v100 = vld [vmem:[%s3 + $0xa8] sm:$0xf]
    %v101 = vld [vmem:[%s3 + $0xac] sm:$0xf]
    %v102 = vld [vmem:[%s3 + $0xb0] sm:$0xf]
    %v103 = vld [vmem:[%s3 + $0xb4] sm:$0xf]
    %v104 = vld [vmem:[%s3 + $0xb8] sm:$0xf]
    %v105 = vld [vmem:[%s3 + $0xbc] sm:$0xf]
    %v154 = vunpack.c.l.b16 %v58
    %v155 = vunpack.c.l.b16 %v59
    %v156 = vunpack.c.l.b16 %v60
    %v157 = vunpack.c.l.b16 %v61
    %v158 = vunpack.c.l.b16 %v62
    %v159 = vunpack.c.l.b16 %v63
    %v160 = vunpack.c.l.b16 %v64
    %v161 = vunpack.c.l.b16 %v65
    %v162 = vunpack.c.l.b16 %v66
    %v163 = vunpack.c.l.b16 %v67
    %v164 = vunpack.c.l.b16 %v68
    %v165 = vunpack.c.l.b16 %v69
    %v166 = vunpack.c.l.b16 %v70
    %v167 = vunpack.c.l.b16 %v71
    %v168 = vunpack.c.l.b16 %v72
    %v169 = vunpack.c.l.b16 %v73
    %v170 = vunpack.c.l.b16 %v74
    %v171 = vunpack.c.l.b16 %v75
    %v172 = vunpack.c.l.b16 %v76
    %v173 = vunpack.c.l.b16 %v77
    %v174 = vunpack.c.l.b16 %v78
    %v175 = vunpack.c.l.b16 %v79
    %v176 = vunpack.c.l.b16 %v80
    %v177 = vunpack.c.l.b16 %v81
    %v178 = vunpack.c.l.b16 %v82
    %v179 = vunpack.c.l.b16 %v83
    %v180 = vunpack.c.l.b16 %v84
    %v181 = vunpack.c.l.b16 %v85
    %v182 = vunpack.c.l.b16 %v86
    %v183 = vunpack.c.l.b16 %v87
    %v184 = vunpack.c.l.b16 %v88
    %v185 = vunpack.c.l.b16 %v89
    %v186 = vunpack.c.l.b16 %v90
    %v187 = vunpack.c.l.b16 %v91
    %v188 = vunpack.c.l.b16 %v92
    %v189 = vunpack.c.l.b16 %v93
    %v190 = vunpack.c.l.b16 %v94
    %v191 = vunpack.c.l.b16 %v95
    %v192 = vunpack.c.l.b16 %v96
    %v193 = vunpack.c.l.b16 %v97
    %v194 = vunpack.c.l.b16 %v98
    %v195 = vunpack.c.l.b16 %v99
    %v196 = vunpack.c.l.b16 %v100
    %v197 = vunpack.c.l.b16 %v101
    %v198 = vunpack.c.l.b16 %v102
    %v199 = vunpack.c.l.b16 %v103
    %v200 = vunpack.c.l.b16 %v104
    %v201 = vunpack.c.l.b16 %v105
    %v202 = vpack.c.b16 %v155, %v154
    %v203 = vpack.c.b16 %v157, %v156
    %v204 = vpack.c.b16 %v159, %v158
    %v205 = vpack.c.b16 %v161, %v160
    %v206 = vpack.c.b16 %v163, %v162
    %v207 = vpack.c.b16 %v165, %v164
    %v208 = vpack.c.b16 %v167, %v166
    %v209 = vpack.c.b16 %v169, %v168
    %v210 = vpack.c.b16 %v171, %v170
    %v211 = vpack.c.b16 %v173, %v172
    %v212 = vpack.c.b16 %v175, %v174
    %v213 = vpack.c.b16 %v177, %v176
    %v214 = vpack.c.b16 %v179, %v178
    %v215 = vpack.c.b16 %v181, %v180
    %v216 = vpack.c.b16 %v183, %v182
    %v217 = vpack.c.b16 %v185, %v184
    %v218 = vpack.c.b16 %v187, %v186
    %v219 = vpack.c.b16 %v189, %v188
    %v220 = vpack.c.b16 %v191, %v190
    %v221 = vpack.c.b16 %v193, %v192
    %v222 = vpack.c.b16 %v195, %v194
    %v223 = vpack.c.b16 %v197, %v196
    %v224 = vpack.c.b16 %v199, %v198
    %v225 = vpack.c.b16 %v201, %v200
    %250 = vmatprep.subr.bf16.mxu0 0
    %251 = vmatpush1.bf16.msra.mxu0 %v209
    %252 = vmatprep.subr.bf16.mxu0 0
    %253 = vmatpush1.bf16.msra.mxu0 %v208
    %254 = vmatprep.subr.bf16.mxu0 0
    %255 = vmatpush1.bf16.msra.mxu0 %v207
    %256 = vmatprep.subr.bf16.mxu0 0
    %257 = vmatpush1.bf16.msra.mxu0 %v206
    %258 = vmatprep.subr.bf16.mxu0 0
    %259 = vmatpush1.bf16.msra.mxu0 %v205
    %260 = vmatprep.subr.bf16.mxu0 0
    %261 = vmatpush1.bf16.msra.mxu0 %v204
    %262 = vmatprep.subr.bf16.mxu0 0
    %263 = vmatpush1.bf16.msra.mxu0 %v203
    %264 = vmatprep.subr.bf16.mxu0 0
    %265 = vmatpush1.bf16.msra.mxu0 %v202
    %266 = vmatprep.subr.bf16.mxu0 0
    %267 = vmatpush2.bf16.msra.mxu0 %v217
    %268 = vmatprep.subr.bf16.mxu0 0
    %269 = vmatpush2.bf16.msra.mxu0 %v216
    %270 = vmatprep.subr.bf16.mxu0 0
    %271 = vmatpush2.bf16.msra.mxu0 %v215
    %272 = vmatprep.subr.bf16.mxu0 0
    %273 = vmatpush2.bf16.msra.mxu0 %v214
    %274 = vmatprep.subr.bf16.mxu0 0
    %275 = vmatpush2.bf16.msra.mxu0 %v213
    %276 = vmatprep.subr.bf16.mxu0 0
    %277 = vmatpush2.bf16.msra.mxu0 %v212
    %278 = vmatprep.subr.bf16.mxu0 0
    %279 = vmatpush2.bf16.msra.mxu0 %v211
    %280 = vmatprep.subr.bf16.mxu0 0
    %281 = vmatpush2.bf16.msra.mxu0 %v210
    %282 = vmatprep.mubr.bf16.mxu0 %v56
    %283 = vmatmul.mubr.bf16.gmra.mxu0 %v55
    %v284 = vpop.f32.mrf.mxu0
    %v285 = vadd.f32 0.0, %v284
    %v286 = vpop.f32.mrf.mxu0
    %v287 = vpop.f32.mrf.mxu0
    %v288 = vpop.f32.mrf.mxu0
    %289 = vdwg.mxu0
    %290 = vmatprep.subr.bf16.mxu0 0
    %291 = vmatpush1.bf16.msra.mxu0 %v225
    %292 = vmatprep.subr.bf16.mxu0 0
    %293 = vmatpush1.bf16.msra.mxu0 %v224
    %294 = vmatprep.subr.bf16.mxu0 0
    %295 = vmatpush1.bf16.msra.mxu0 %v223
    %296 = vmatprep.subr.bf16.mxu0 0
    %297 = vmatpush1.bf16.msra.mxu0 %v222
    %298 = vmatprep.subr.bf16.mxu0 0
    %299 = vmatpush1.bf16.msra.mxu0 %v221
    %300 = vmatprep.subr.bf16.mxu0 0
    %301 = vmatpush1.bf16.msra.mxu0 %v220
    %302 = vmatprep.subr.bf16.mxu0 0
    %303 = vmatpush1.bf16.msra.mxu0 %v219
    %304 = vmatprep.subr.bf16.mxu0 0
    %305 = vmatpush1.bf16.msra.mxu0 %v218
    %306 = vmatprep.subr.bf16.mxu0 0
    %307 = vmatpush2.bf16.msra.mxu0 0
    %308 = vmatprep.subr.bf16.mxu0 0
    %309 = vmatpush2.bf16.msra.mxu0 0
    %310 = vmatprep.subr.bf16.mxu0 0
    %311 = vmatpush2.bf16.msra.mxu0 0
    %312 = vmatprep.subr.bf16.mxu0 0
    %313 = vmatpush2.bf16.msra.mxu0 0
    %314 = vmatprep.subr.bf16.mxu0 0
    %315 = vmatpush2.bf16.msra.mxu0 0
    %316 = vmatprep.subr.bf16.mxu0 0
    %317 = vmatpush2.bf16.msra.mxu0 0
    %318 = vmatprep.subr.bf16.mxu0 0
    %319 = vmatpush2.bf16.msra.mxu0 0
    %320 = vmatprep.subr.bf16.mxu0 0
    %321 = vmatpush2.bf16.msra.mxu0 0
    %322 = vmatprep.mubr.bf16.mxu0 0
    %323 = vmatmul.mubr.bf16.gmra.mxu0 %v57
    %v324 = vpop.f32.mrf.mxu0
    %v325 = vadd.f32 %v285, %v324
    %v326 = vpop.f32.mrf.mxu0
    %v327 = vpop.f32.mrf.mxu0
    %v328 = vpop.f32.mrf.mxu0
    %329 = vdwg.mxu0
    %330 = vmatprep.subr.bf16.mxu0 0
    %331 = vmatpush1.bf16.msra.mxu0 %v209
    %332 = vmatprep.subr.bf16.mxu0 0
    %333 = vmatpush1.bf16.msra.mxu0 %v208
    %334 = vmatprep.subr.bf16.mxu0 0
    %335 = vmatpush1.bf16.msra.mxu0 %v207
    %336 = vmatprep.subr.bf16.mxu0 0
    %337 = vmatpush1.bf16.msra.mxu0 %v206
    %338 = vmatprep.subr.bf16.mxu0 0
    %339 = vmatpush1.bf16.msra.mxu0 %v205
    %340 = vmatprep.subr.bf16.mxu0 0
    %341 = vmatpush1.bf16.msra.mxu0 %v204
    %342 = vmatprep.subr.bf16.mxu0 0
    %343 = vmatpush1.bf16.msra.mxu0 %v203
    %344 = vmatprep.subr.bf16.mxu0 0
    %345 = vmatpush1.bf16.msra.mxu0 %v202
    %346 = vmatprep.subr.bf16.mxu0 0
    %347 = vmatpush2.bf16.msra.mxu0 %v217
    %348 = vmatprep.subr.bf16.mxu0 0
    %349 = vmatpush2.bf16.msra.mxu0 %v216
    %350 = vmatprep.subr.bf16.mxu0 0
    %351 = vmatpush2.bf16.msra.mxu0 %v215
    %352 = vmatprep.subr.bf16.mxu0 0
    %353 = vmatpush2.bf16.msra.mxu0 %v214
    %354 = vmatprep.subr.bf16.mxu0 0
    %355 = vmatpush2.bf16.msra.mxu0 %v213
    %356 = vmatprep.subr.bf16.mxu0 0
    %357 = vmatpush2.bf16.msra.mxu0 %v212
    %358 = vmatprep.subr.bf16.mxu0 0
    %359 = vmatpush2.bf16.msra.mxu0 %v211
    %360 = vmatprep.subr.bf16.mxu0 0
    %361 = vmatpush2.bf16.msra.mxu0 %v210
    %362 = vmatprep.mubr.bf16.mxu0 %v47
    %363 = vmatmul.mubr.bf16.gmra.mxu0 %v46
    %v364 = vpop.f32.mrf.mxu0
    %v365 = vadd.f32 %v325, %v364
    %v366 = vpop.f32.mrf.mxu0
    %v367 = vpop.f32.mrf.mxu0
    %v368 = vpop.f32.mrf.mxu0
    %369 = vdwg.mxu0
    %370 = vmatprep.subr.bf16.mxu0 0
    %371 = vmatpush1.bf16.msra.mxu0 %v225
    %372 = vmatprep.subr.bf16.mxu0 0
    %373 = vmatpush1.bf16.msra.mxu0 %v224
    %374 = vmatprep.subr.bf16.mxu0 0
    %375 = vmatpush1.bf16.msra.mxu0 %v223
    %376 = vmatprep.subr.bf16.mxu0 0
    %377 = vmatpush1.bf16.msra.mxu0 %v222
    %378 = vmatprep.subr.bf16.mxu0 0
    %379 = vmatpush1.bf16.msra.mxu0 %v221
    %380 = vmatprep.subr.bf16.mxu0 0
    %381 = vmatpush1.bf16.msra.mxu0 %v220
    %382 = vmatprep.subr.bf16.mxu0 0
    %383 = vmatpush1.bf16.msra.mxu0 %v219
    %384 = vmatprep.subr.bf16.mxu0 0
    %385 = vmatpush1.bf16.msra.mxu0 %v218
    %386 = vmatprep.subr.bf16.mxu0 0
    %387 = vmatpush2.bf16.msra.mxu0 0
    %388 = vmatprep.subr.bf16.mxu0 0
    %389 = vmatpush2.bf16.msra.mxu0 0
    %390 = vmatprep.subr.bf16.mxu0 0
    %391 = vmatpush2.bf16.msra.mxu0 0
    %392 = vmatprep.subr.bf16.mxu0 0
    %393 = vmatpush2.bf16.msra.mxu0 0
    %394 = vmatprep.subr.bf16.mxu0 0
    %395 = vmatpush2.bf16.msra.mxu0 0
    %396 = vmatprep.subr.bf16.mxu0 0
    %397 = vmatpush2.bf16.msra.mxu0 0
    %398 = vmatprep.subr.bf16.mxu0 0
    %399 = vmatpush2.bf16.msra.mxu0 0
    %400 = vmatprep.subr.bf16.mxu0 0
    %401 = vmatpush2.bf16.msra.mxu0 0
    %402 = vmatprep.mubr.bf16.mxu0 0
    %403 = vmatmul.mubr.bf16.gmra.mxu0 %v48
    %v404 = vpop.f32.mrf.mxu0
    %v405 = vadd.f32 %v365, %v404
    %v406 = vpop.f32.mrf.mxu0
    %v407 = vpop.f32.mrf.mxu0
    %v408 = vpop.f32.mrf.mxu0
    %409 = vdwg.mxu0
    %v410 = vmax.f32 %v405, 0.0
    %v411 = vrsqrt.pop %v410
    %v412 = vmul.f32 %v410, %v411
    %vm413 = vcmp.eq.f32.partialorder %v410, inf
    %v414 = vsel %vm413, %v410, %v412
    %vm415 = vcmp.eq.f32.partialorder %v410, 0.0
    %v416 = vand.u32 %v410, 2147483648
    %v417 = vsel %vm415, %v416, %v414
    %s418 = sld [smem:[#allocation2]]
    %v419 = vstv %s418
    %v420 = vsub.f32 %v417, %v419
    %421 = vst [vmem:[#allocation3] sm:$0xff] %v420
    // Predicated region
    $region18: #{sphere_sdf_distance.1} parent=1 // pred_check
      _
    $region19: #{sphere_sdf_distance.1} parent=1 // pred_check_branch
      %423 = sbr.rel (0) target = $region21
    $region20: #{sphere_sdf_distance.1} parent=1 // pred_region
      %s425 = ssub.s32 128, 128
      %426 = vsyncadd [#allocation4], %s425
      %s428 = sshll.u32 [#allocation3], 4
      %s429 = int_to_ptr.vmem [resolvable:$true] %s428
      %431 = dma.vmem_to_hbm [thread:$0]  %s429, 128, %s4, [#allocation4]
    $region21: #{sphere_sdf_distance.1} parent=1 // pred_fallthru
      _
    // Predicated region
    $region22: #{sphere_sdf_distance.1} parent=1 // pred_check
      _
    $region23: #{sphere_sdf_distance.1} parent=1 // pred_check_branch
      %433 = sbr.rel (0) target = $region25
    $region24: #{sphere_sdf_distance.1} parent=1 // pred_region
      %434 = dma.done [#allocation4], 128
    $region25: #{sphere_sdf_distance.1} parent=1 // pred_fallthru
      _
    %435 = vsyncpa [#allocation4], 1

</llo_original>
